<compile_context>
chip_gen: v6e
topology: v6e:2x2x1
jax: 0.10.0
libtpu: 0.0.40
codegen_flags: <defaults>
</compile_context>

<pallas_src>
import functools
import numpy as np
import jax
import jax.numpy as jnp
from jax.experimental import pallas as pl
from jax.experimental.pallas import tpu as pltpu


CHANNELS = 32
IM_SHAPE = (16, 16)
BATCH = 2


# -------------------------- math helpers (kernel + reference) --------------------------

def _gelu(x, exact):
    if exact:
        # exact erf-based GELU == torch.nn.functional.gelu default ('none')
        return 0.5 * x * (1.0 + jax.lax.erf(x * np.float32(1.0 / np.sqrt(2.0))))
    # tanh-approx fallback only if lax.erf fails to lower on this TPU.
    c = np.float32(np.sqrt(2.0 / np.pi))
    return 0.5 * x * (1.0 + jnp.tanh(c * (x + np.float32(0.044715) * x * x * x)))


@functools.lru_cache(maxsize=1)
def _erf_supported():
    """Probe (once, cached) whether lax.erf lowers inside a Pallas TPU kernel."""
    def k(x_ref, o_ref):
        o_ref[...] = jax.lax.erf(x_ref[...])
    try:
        jax.block_until_ready(
            pl.pallas_call(k, out_shape=jax.ShapeDtypeStruct((8, 128), jnp.float32))(
                jnp.zeros((8, 128), jnp.float32)))
        return True
    except Exception:
        return False


@functools.lru_cache(maxsize=1)
def _roll_direction():
    """+1 if pltpu.roll matches np.roll semantics (out[i] = x[i - shift]), else -1."""
    def k(x_ref, o_ref):
        o_ref[...] = pltpu.roll(x_ref[...], 1, axis=1)
    x = jnp.tile(jnp.arange(128, dtype=jnp.float32)[None, :], (8, 1))
    out = jax.block_until_ready(
        pl.pallas_call(k, out_shape=jax.ShapeDtypeStruct((8, 128), jnp.float32))(x))
    return 1 if float(out[0, 0]) == 127.0 else -1


# ------------------------------ fused Pallas kernel ------------------------------

def _resblock_kernel(x_ref, w1_ref, w2_ref, bn_ref, o_ref, *, H, W, exact_gelu, roll_sign):
    """Whole ResidualBlock forward on one VMEM-resident (C, R=N*H*W) tile.

    conv3x3 = 9 accumulating MXU dots, one per tap; each tap's activation is a
    static lane-roll of the channels-major tile plus a boundary mask (this is
    the in-kernel im2col -- activations are read from HBM exactly once).
    """
    C, R = x_ref.shape
    x = x_ref[...]                                          # (C, R) f32, also the residual

    # Output-position coordinates along the flat r = n*H*W + h*W + w axis.
    r = jax.lax.broadcasted_iota(jnp.int32, (1, R), 1)
    w_idx = r % W
    h_idx = (r // W) % H

    # 3x3 taps: per-tap lane shift + validity mask. The mask zeroes exactly the
    # padding=1 / image-boundary lanes (which are also the lanes roll wraps).
    taps = []
    for dy in (-1, 0, 1):
        for dx in (-1, 0, 1):
            s = dy * W + dx
            shift = ((-s) if roll_sign > 0 else s) % R
            valid = ((h_idx + dy >= 0) & (h_idx + dy < H) &
                     (w_idx + dx >= 0) & (w_idx + dx < W))
            taps.append((shift, valid.astype(jnp.float32)))  # (1, R) f32 mask

    def conv3x3(a, w_ref_):
        # a: (C, R) f32 -> (C, R) f32. Conv bias omitted: a per-channel constant
        # cancels exactly under training-mode (batch-stat) BatchNorm.
        acc = jnp.zeros((C, R), jnp.float32)
        for k, (shift, mask) in enumerate(taps):
            shifted = a if shift == 0 else pltpu.roll(a, shift, axis=1)
            tap = (shifted * mask).astype(jnp.bfloat16)      # bf16 MXU input
            acc = acc + jnp.dot(w_ref_[k], tap, preferred_element_type=jnp.float32)
        return acc

    def bn(y, g, be):
        # BatchNorm2d training-mode batch stats: per-channel over R = N*H*W,
        # biased variance, eps=1e-5, affine; scale folded into one (C,1) factor.
        mean = jnp.mean(y, axis=1, keepdims=True)            # (C, 1)
        diff = y - mean
        var = jnp.mean(diff * diff, axis=1, keepdims=True)   # biased
        scale = g * jax.lax.rsqrt(var + np.float32(1e-5))    # (C, 1), EUP rsqrt
        return diff * scale + be

    # packed per-channel params: [gamma1 | beta1 | gamma2 | beta2] along sublanes
    g1, be1 = bn_ref[0 * C:1 * C, :], bn_ref[1 * C:2 * C, :]
    g2, be2 = bn_ref[2 * C:3 * C, :], bn_ref[3 * C:4 * C, :]

    t = _gelu(bn(conv3x3(x, w1_ref), g1, be1), exact_gelu)   # stage 1, never leaves VMEM
    out = bn(conv3x3(t, w2_ref), g2, be2) + x                # stage 2 + residual
    o_ref[...] = _gelu(out, exact_gelu).astype(o_ref.dtype)


# ------------------------------ JAX glue (fused under jit) ------------------------------

def _w_oihw_to_taps(w_oihw):
    """torch-layout weight (Cout, Cin, 3, 3) -> (9, Cout, Cin); tap k = ky*3 + kx,
    matching the kernel's (dy, dx) loop order (dy = ky - 1, dx = kx - 1)."""
    cout, cin = w_oihw.shape[0], w_oihw.shape[1]
    return jnp.transpose(w_oihw, (2, 3, 0, 1)).reshape(9, cout, cin)


def residual_block_forward(x_nchw, params, *, exact_gelu, roll_sign):
    """Mirrors ResidualBlock.forward; x: NCHW."""
    N, C, H, W = x_nchw.shape
    R = N * H * W
    x_cr = jnp.transpose(x_nchw, (1, 0, 2, 3)).reshape(C, R).astype(jnp.float32)

    w1t = _w_oihw_to_taps(params["w1"]).astype(jnp.bfloat16)       # (9, C, C)
    w2t = _w_oihw_to_taps(params["w2"]).astype(jnp.bfloat16)       # (9, C, C)
    bn_packed = jnp.concatenate(
        [params["g1"], params["be1"], params["g2"], params["be2"]], axis=0)  # (4C, 1) f32

    kern = functools.partial(_resblock_kernel, H=H, W=W,
                             exact_gelu=exact_gelu, roll_sign=roll_sign)
    vmem = pl.BlockSpec(memory_space=pltpu.MemorySpace.VMEM)
    out_cr = pl.pallas_call(
        kern,
        out_shape=jax.ShapeDtypeStruct((C, R), jnp.float32),
        in_specs=[vmem, vmem, vmem, vmem],
        out_specs=vmem,
    )(x_cr, w1t, w2t, bn_packed)

    return jnp.transpose(out_cr.reshape(C, N, H, W), (1, 0, 2, 3))  # back to NCHW


# ------------------------------ pure-JAX reference ------------------------------

def residual_block_ref(x, p, exact_gelu):
    def conv(x, w, b):
        y = jax.lax.conv_general_dilated(
            x, w, window_strides=(1, 1), padding=((1, 1), (1, 1)),
            dimension_numbers=("NCHW", "OIHW", "NCHW"))
        return y + b.reshape(1, -1, 1, 1)

    def bn(y, g, be):
        mean = jnp.mean(y, axis=(0, 2, 3), keepdims=True)
        var = jnp.mean((y - mean) ** 2, axis=(0, 2, 3), keepdims=True)
        return ((y - mean) * jax.lax.rsqrt(var + np.float32(1e-5))
                * g.reshape(1, -1, 1, 1) + be.reshape(1, -1, 1, 1))

    out = _gelu(bn(conv(x, p["w1"], p["b1"]), p["g1"], p["be1"]), exact_gelu)
    out = bn(conv(out, p["w2"], p["b2"]), p["g2"], p["be2"]) + x
    return _gelu(out, exact_gelu)


# ------------------------------ params ------------------------------

def init_params(key):
    """Deterministic synthetic parameters (shapes match ResidualBlock(channels))."""
    def conv_p(k, c):
        kw, kb = jax.random.split(k)
        w = 0.1 * jax.random.normal(kw, (c, c, 3, 3), jnp.float32)   # OIHW (torch layout)
        b = 0.05 * jax.random.normal(kb, (c, 1), jnp.float32)        # reference-only: cancels under BN
        return w, b

    def bn_p(k, c):
        kg, kb = jax.random.split(k)
        return (1.0 + 0.1 * jax.random.normal(kg, (c, 1), jnp.float32),
                0.1 * jax.random.normal(kb, (c, 1), jnp.float32))

    k1, k2, k3, k4 = jax.random.split(key, 4)
    w1, b1 = conv_p(k1, CHANNELS)
    g1, be1 = bn_p(k2, CHANNELS)
    w2, b2 = conv_p(k3, CHANNELS)
    g2, be2 = bn_p(k4, CHANNELS)
    return dict(w1=w1, b1=b1, g1=g1, be1=be1, w2=w2, b2=b2, g2=g2, be2=be2)


# ------------------------------------ main ------------------------------------

if __name__ == "__main__":
    key = jax.random.PRNGKey(0)
    kx, kp = jax.random.split(key)

    x = jax.random.normal(kx, (BATCH, CHANNELS, IM_SHAPE[0], IM_SHAPE[1]), jnp.float32)
    params = init_params(kp)

    exact_gelu = _erf_supported()      # probed once, cached (outside hot path)
    roll_sign = _roll_direction()      # probed once, cached (outside hot path)

    fwd = jax.jit(functools.partial(residual_block_forward,
                                    exact_gelu=exact_gelu, roll_sign=roll_sign))
    out = jax.block_until_ready(fwd(x, params))

    assert out.shape == x.shape, out.shape
    assert bool(jnp.all(jnp.isfinite(out)))

    # Correctness vs. pure-JAX f32 reference (which keeps the conv biases; the
    # kernel drops them because they cancel under batch-stat BN). bf16 MXU
    # inputs introduce ~1e-2 absolute deviation; layout/ordering bugs would be O(1).
    ref = residual_block_ref(x, params, exact_gelu)
    max_err = float(jnp.max(jnp.abs(out - ref)))
    assert max_err < 5e-2, f"max abs error vs reference: {max_err}"

    print("KERNEL_OK")
</pallas_src>

<mosaic_0001>
module attributes {stable_mosaic.version = 11 : i64} {
  func.func @k(%arg0: memref<8x128xf32, #tpu.memory_space<vmem>>, %arg1: memref<8x128xf32, #tpu.memory_space<vmem>>) attributes {dimension_semantics = [], scalar_prefetch = 0 : i64, scratch_operands = 0 : i64, tpu.core_type = #tpu.core_type<tc>} {
    %c0 = arith.constant 0 : index
    %c0_0 = arith.constant 0 : index
    %0 = vector.load %arg0[%c0, %c0_0] : memref<8x128xf32, #tpu.memory_space<vmem>>, vector<8x128xf32>
    %1 = math.erf %0 : vector<8x128xf32>
    %c0_1 = arith.constant 0 : index
    %c0_2 = arith.constant 0 : index
    %2 = vector.load %arg1[%c0_1, %c0_2] : memref<8x128xf32, #tpu.memory_space<vmem>>, vector<8x128xf32>
    tpu.vector_store %arg1[%c0_1, %c0_2], %1 {strides = array<i32>} : memref<8x128xf32, #tpu.memory_space<vmem>>, vector<8x128xf32>,
    return
  }
}

module attributes {stable_mosaic.version = 11 : i64} {
  func.func @k(%arg0: memref<8x128xf32, #tpu.memory_space<vmem>>, %arg1: memref<8x128xf32, #tpu.memory_space<vmem>>) attributes {dimension_semantics = [], scalar_prefetch = 0 : i64, scratch_operands = 0 : i64, tpu.core_type = #tpu.core_type<tc>} {
    %c0 = arith.constant 0 : index
    %c0_0 = arith.constant 0 : index
    %0 = vector.load %arg0[%c0, %c0_0] : memref<8x128xf32, #tpu.memory_space<vmem>>, vector<8x128xf32>
    %c1_i32 = arith.constant 1 : i32
    %1 = tpu.dynamic_rotate %0 by %c1_i32 dim 1 : vector<8x128xf32>, i32 -> vector<8x128xf32>
    %c0_1 = arith.constant 0 : index
    %c0_2 = arith.constant 0 : index
    %2 = vector.load %arg1[%c0_1, %c0_2] : memref<8x128xf32, #tpu.memory_space<vmem>>, vector<8x128xf32>
    tpu.vector_store %arg1[%c0_1, %c0_2], %1 {strides = array<i32>} : memref<8x128xf32, #tpu.memory_space<vmem>>, vector<8x128xf32>,
    return
  }
}

</mosaic_0001>

<llo_original>
// kernel: tpu_custom_call.1
$region0: #{tpu_custom_call.1}
  #allocation0 [shape = 'u32[]', space=smem, size = 0x4, offset = 0x4, fixed_abs, tag = 'smem constant byte address 0x4 - core index']
  #allocation1 [shape = 'u32[144,128]{1,0:T(1,128)}', space=vmem, size = 0x12000, scoped, tag = 'internal scratch']
  %s0 = inlined_call_operand.hbm [shape: f32[8,128], index: 0, kind: input, shape index: {}]
  %s1 = inlined_call_operand.hbm [shape: f32[8,128], index: 1, kind: output, shape index: {}]
  %s2 = sld [smem:[#allocation0]]
  $region18: #{tpu_custom_call.1} parent=0
    _
  %s4 = ssub.s32 1, %s2
  %s5 = scalar_select 0, %s4, %s2
  $region1: #{tpu_custom_call.1} parent=0
    #allocation2 [shape = 'u8[4096]{0}', space=vmem, size = 0x1000, scoped, tag = 'input window, operand 0, single buffered']
    #allocation3 [shape = 's32[1]{0}', space=sflag, size = 0x4, scoped, tag = 'scoped memory for tpu_custom_call.1']
    #allocation4 [shape = 's32[1]{0}', space=sflag, size = 0x4, scoped, tag = 'scoped memory for tpu_custom_call.1']
    #allocation5 [shape = 'u8[4096]{0}', space=vmem, size = 0x1000, scoped, tag = 'output window, operand 0, single buffered']
    %6 = vsyncpa [#allocation3], 0
    %7 = vsyncpa [#allocation4], 0
    // Predicated region
    $region2: #{tpu_custom_call.1} parent=1 // pred_check
      _
    $region3: #{tpu_custom_call.1} parent=1 // pred_check_branch
      %9 = sbr.rel (0) target = $region5
    $region4: #{tpu_custom_call.1} parent=1 // pred_region
      %s11 = ssub.s32 128, 128
      %12 = vsyncadd [#allocation3], %s11
      %s14 = sshll.u32 [#allocation2], 4
      %s15 = int_to_ptr.vmem [resolvable:$true] %s14
      %17 = dma.hbm_to_vmem [thread:$0]  %s0, 128, %s15, [#allocation3]
    $region5: #{tpu_custom_call.1} parent=1 // pred_fallthru
      _
    // Predicated region
    $region6: #{tpu_custom_call.1} parent=1 // pred_check
      _
    $region7: #{tpu_custom_call.1} parent=1 // pred_check_branch
      %19 = sbr.rel (0) target = $region9
    $region8: #{tpu_custom_call.1} parent=1 // pred_region
      %20 = dma.done [#allocation3], 128
    $region9: #{tpu_custom_call.1} parent=1 // pred_fallthru
      _
    %v21 = vld [vmem:[#allocation2] sm:$0xff]
    %v22 = verf.f32.pop %v21
    %23 = vst [vmem:[#allocation5] sm:$0xff] %v22
    // Predicated region
    $region10: #{tpu_custom_call.1} parent=1 // pred_check
      _
    $region11: #{tpu_custom_call.1} parent=1 // pred_check_branch
      %25 = sbr.rel (0) target = $region13
    $region12: #{tpu_custom_call.1} parent=1 // pred_region
      %s27 = ssub.s32 128, 128
      %28 = vsyncadd [#allocation4], %s27
      %s30 = sshll.u32 [#allocation5], 4
      %s31 = int_to_ptr.vmem [resolvable:$true] %s30
      %33 = dma.vmem_to_hbm [thread:$0]  %s31, 128, %s1, [#allocation4]
    $region13: #{tpu_custom_call.1} parent=1 // pred_fallthru
      _
    // Predicated region
    $region14: #{tpu_custom_call.1} parent=1 // pred_check
      _
    $region15: #{tpu_custom_call.1} parent=1 // pred_check_branch
      %35 = sbr.rel (0) target = $region17
    $region16: #{tpu_custom_call.1} parent=1 // pred_region
      %36 = dma.done [#allocation4], 128
    $region17: #{tpu_custom_call.1} parent=1 // pred_fallthru
      _
    %37 = vsyncpa [#allocation3], 1
    %38 = vsyncpa [#allocation4], 1

// kernel: tpu_custom_call.1
$region0: #{tpu_custom_call.1}
  #allocation0 [shape = 'u32[]', space=smem, size = 0x4, offset = 0x4, fixed_abs, tag = 'smem constant byte address 0x4 - core index']
  #allocation1 [shape = 'u32[144,128]{1,0:T(1,128)}', space=vmem, size = 0x12000, scoped, tag = 'internal scratch']
  %s0 = inlined_call_operand.hbm [shape: f32[8,128], index: 0, kind: input, shape index: {}]
  %s1 = inlined_call_operand.hbm [shape: f32[8,128], index: 1, kind: output, shape index: {}]
  %s2 = sld [smem:[#allocation0]]
  $region18: #{tpu_custom_call.1} parent=0
    _
  %s4 = ssub.s32 1, %s2
  %s5 = scalar_select 0, %s4, %s2
  $region1: #{tpu_custom_call.1} parent=0
    #allocation2 [shape = 'u8[4096]{0}', space=vmem, size = 0x1000, scoped, tag = 'input window, operand 0, single buffered']
    #allocation3 [shape = 's32[1]{0}', space=sflag, size = 0x4, scoped, tag = 'scoped memory for tpu_custom_call.1']
    #allocation4 [shape = 's32[1]{0}', space=sflag, size = 0x4, scoped, tag = 'scoped memory for tpu_custom_call.1']
    #allocation5 [shape = 'u8[4096]{0}', space=vmem, size = 0x1000, scoped, tag = 'output window, operand 0, single buffered']
    %6 = vsyncpa [#allocation3], 0
    %7 = vsyncpa [#allocation4], 0
    // Predicated region
    $region2: #{tpu_custom_call.1} parent=1 // pred_check
      _
    $region3: #{tpu_custom_call.1} parent=1 // pred_check_branch
      %9 = sbr.rel (0) target = $region5
    $region4: #{tpu_custom_call.1} parent=1 // pred_region
      %s11 = ssub.s32 128, 128
      %12 = vsyncadd [#allocation3], %s11
      %s14 = sshll.u32 [#allocation2], 4
      %s15 = int_to_ptr.vmem [resolvable:$true] %s14
      %17 = dma.hbm_to_vmem [thread:$0]  %s0, 128, %s15, [#allocation3]
    $region5: #{tpu_custom_call.1} parent=1 // pred_fallthru
      _
    // Predicated region
    $region6: #{tpu_custom_call.1} parent=1 // pred_check
      _
    $region7: #{tpu_custom_call.1} parent=1 // pred_check_branch
      %19 = sbr.rel (0) target = $region9
    $region8: #{tpu_custom_call.1} parent=1 // pred_region
      %20 = dma.done [#allocation3], 128
    $region9: #{tpu_custom_call.1} parent=1 // pred_fallthru
      _
    %v21 = vld [vmem:[#allocation2] sm:$0xff]
    %22 = vrot.lane.b32.xlu0 %v21, 1
    %v23 = vpop.permute.xlu0 %22
    %24 = vst [vmem:[#allocation5] sm:$0xff] %v23
    // Predicated region
    $region10: #{tpu_custom_call.1} parent=1 // pred_check
      _
    $region11: #{tpu_custom_call.1} parent=1 // pred_check_branch
      %26 = sbr.rel (0) target = $region13
    $region12: #{tpu_custom_call.1} parent=1 // pred_region
      %s28 = ssub.s32 128, 128
      %29 = vsyncadd [#allocation4], %s28
      %s31 = sshll.u32 [#allocation5], 4
      %s32 = int_to_ptr.vmem [resolvable:$true] %s31
      %34 = dma.vmem_to_hbm [thread:$0]  %s32, 128, %s1, [#allocation4]
    $region13: #{tpu_custom_call.1} parent=1 // pred_fallthru
      _
    // Predicated region
    $region14: #{tpu_custom_call.1} parent=1 // pred_check
      _
    $region15: #{tpu_custom_call.1} parent=1 // pred_check_branch
      %36 = sbr.rel (0) target = $region17
    $region16: #{tpu_custom_call.1} parent=1 // pred_region
      %37 = dma.done [#allocation4], 128
    $region17: #{tpu_custom_call.1} parent=1 // pred_fallthru
      _
    %38 = vsyncpa [#allocation3], 1
    %39 = vsyncpa [#allocation4], 1

</llo_original>
